<compile_context>
chip_gen: v7x
topology: tpu7x:2x2x1
jax: 0.10.0
libtpu: 0.0.40
codegen_flags: <defaults>
</compile_context>

<pallas_src>
import functools

import jax
import jax.numpy as jnp
import numpy as np
from jax import lax
from jax.experimental import pallas as pl
from jax.experimental.pallas import tpu as pltpu


def _round_up(x, m):
    return (x + m - 1) // m * m


def _multilinear_kernel(id_ref, x_ref, w_ref, b_ref, o_ref, *, block_b):
    """One grid step handles `block_b` batch rows.

    id_ref: (B,) int32 in SMEM (scalar-prefetched)
    x_ref : (block_b, N_p, Ci_p)   per-step input tile
    w_ref : (L, Ci_p, Co_p)        whole weight bank, VMEM-resident
    b_ref : (L, Co_p)              whole bias bank, VMEM-resident
    o_ref : (block_b, N_p, Co_p)
    """
    base = pl.program_id(0) * block_b

    def body(r, carry):
        lid = id_ref[base + r]                       # which linear for this row
        acc = jnp.dot(x_ref[r], w_ref[lid],
                      preferred_element_type=jnp.float32)
        acc = acc + b_ref[pl.ds(lid, 1), :].astype(jnp.float32)   # (1, Co) bcast
        o_ref[r] = acc.astype(o_ref.dtype)
        return carry

    lax.fori_loop(0, block_b, body, 0, unroll=True)


def multilinear_forward(x, W, b, ids, *, compute_dtype=None,
                        vmem_budget_bytes=8 * 1024 * 1024):
    """out[i] = x[i] @ W[ids[i]] + b[ids[i]]  (bias broadcast over N)."""
    B, N, C_in = x.shape
    L, _, C_out = W.shape
    out_dtype = x.dtype

    # Optional bf16 operands (f32 accumulate) for v6e / v7x bf16 MXU.
    if compute_dtype is not None:
        x = x.astype(compute_dtype)
        W = W.astype(compute_dtype)

    # Keep id lookups in range: OOB indexing on a VMEM ref is unchecked.
    ids = jnp.clip(ids.astype(jnp.int32), 0, L - 1)

    # Pad to lane/sublane-dense shapes. Zero padding is exact: padded K columns
    # contribute 0 to the contraction; padded N rows / C_out columns are
    # sliced off at the end.
    N_p = _round_up(N, 8)
    Ci_p = _round_up(C_in, 128)
    Co_p = _round_up(C_out, 128)
    if (N_p, Ci_p) != (N, C_in):
        x = jnp.pad(x, ((0, 0), (0, N_p - N), (0, Ci_p - C_in)))
    if (Ci_p, Co_p) != (C_in, C_out):
        W = jnp.pad(W, ((0, 0), (0, Ci_p - C_in), (0, Co_p - C_out)))
    if Co_p != C_out:
        b = jnp.pad(b, ((0, 0), (0, Co_p - C_out)))

    # Batch rows per grid step: as many as fit a VMEM budget for the
    # double-buffered x / out tiles (capped so the unrolled loop stays small).
    in_isz = jnp.dtype(x.dtype).itemsize
    out_isz = jnp.dtype(out_dtype).itemsize
    per_row = 2 * N_p * (Ci_p * in_isz + Co_p * out_isz)  # 2x: double buffering
    block_b = max(1, min(B, 16, vmem_budget_bytes // max(per_row, 1)))
    while B % block_b:                                    # keep the grid exact
        block_b -= 1
    grid = (B // block_b,)

    bank_bytes = (L * Ci_p * Co_p * jnp.dtype(W.dtype).itemsize
                  + L * Co_p * jnp.dtype(b.dtype).itemsize)
    vmem_limit = int(min(
        max(2 * bank_bytes + block_b * per_row + (4 << 20), 32 << 20),
        100 * 1024 * 1024))

    grid_spec = pltpu.PrefetchScalarGridSpec(
        num_scalar_prefetch=1,
        grid=grid,
        in_specs=[
            # Per-step tile of block_b batch rows.
            pl.BlockSpec((block_b, N_p, Ci_p), lambda i, id_ref: (i, 0, 0)),
            # Whole weight / bias banks, constant block index -> VMEM-resident,
            # no per-step re-DMA from HBM.
            pl.BlockSpec((L, Ci_p, Co_p), lambda i, id_ref: (0, 0, 0)),
            pl.BlockSpec((L, Co_p), lambda i, id_ref: (0, 0)),
        ],
        out_specs=pl.BlockSpec((block_b, N_p, Co_p),
                               lambda i, id_ref: (i, 0, 0)),
    )

    out_padded = pl.pallas_call(
        functools.partial(_multilinear_kernel, block_b=block_b),
        out_shape=jax.ShapeDtypeStruct((B, N_p, Co_p), out_dtype),
        grid_spec=grid_spec,
        compiler_params=pltpu.CompilerParams(
            # Disjoint output block per step -> shard across v7x's 2 TCs.
            dimension_semantics=("parallel",),
            vmem_limit_bytes=vmem_limit,
        ),
    )(ids, x, W, b)

    return out_padded[:, :N, :C_out]


if __name__ == "__main__":
    # Module hyperparameters (consistent with MultiLinear.__init__)
    in_channels = 32
    out_channels = 32
    num_linears = 2
    b_init_value = 0.1

    # Small example shapes: batch=2, seq=8
    B, N = 2, 8

    key = jax.random.PRNGKey(0)
    k_w, k_x = jax.random.split(key)

    # Deterministic parameter init mirroring the PyTorch module:
    #   W ~ Uniform(-1/sqrt(in_channels), 1/sqrt(in_channels)), b = b_init_value
    bound = 1.0 / np.sqrt(in_channels)
    W = jax.random.uniform(
        k_w, (num_linears, in_channels, out_channels),
        minval=-bound, maxval=bound, dtype=jnp.float32)
    b = jnp.full((num_linears, out_channels), b_init_value, dtype=jnp.float32)

    x = jax.random.normal(k_x, (B, N, in_channels), dtype=jnp.float32)
    ids = jnp.array([1, 0], dtype=jnp.int32)

    out = multilinear_forward(x, W, b, ids)
    out = jax.block_until_ready(out)

    # Pure-JAX reference of the torch forward (bmm + broadcast bias)
    ref = jnp.einsum("bnc,bco->bno", x, W[ids]) + b[ids][:, None, :]
    np.testing.assert_allclose(np.asarray(out), np.asarray(ref),
                               rtol=1e-5, atol=1e-5)

    print("KERNEL_OK")
</pallas_src>

<mosaic_0001>
module attributes {stable_mosaic.version = 11 : i64} {
  func.func @_multilinear_kernel(%arg0: i32, %arg1: memref<2xi32, #tpu.memory_space<smem>>, %arg2: memref<2x8x128xf32, #tpu.memory_space<vmem>>, %arg3: memref<2x128x128xf32, #tpu.memory_space<vmem>>, %arg4: memref<2x128xf32, #tpu.memory_space<vmem>>, %arg5: memref<2x8x128xf32, #tpu.memory_space<vmem>>) attributes {dimension_semantics = [#tpu.dimension_semantics<parallel>], iteration_bounds = array<i64: 1>, scalar_prefetch = 1 : i64, scratch_operands = 0 : i64, tpu.core_type = #tpu.core_type<tc>, window_params = [{transform_indices = @transform_0, window_bounds = array<i64: 2, 8, 128>}, {pipeline_mode = #tpu.pipeline_mode<synchronous>, transform_indices = @transform_1, window_bounds = array<i64: 2, 128, 128>}, {pipeline_mode = #tpu.pipeline_mode<synchronous>, transform_indices = @transform_2, window_bounds = array<i64: 2, 128>}, {transform_indices = @transform_3, window_bounds = array<i64: 2, 8, 128>}]} {
    %c2_i32 = arith.constant 2 : i32
    %0 = arith.muli %arg0, %c2_i32 : i32
    %c0_i32 = arith.constant 0 : i32
    %1 = arith.addi %0, %c0_i32 : i32
    %2 = arith.index_cast %1 : i32 to index
    %3 = memref.load %arg1[%2] : memref<2xi32, #tpu.memory_space<smem>>
    %4 = arith.index_cast %c0_i32 : i32 to index
    %c0 = arith.constant 0 : index
    %c0_0 = arith.constant 0 : index
    %5 = vector.load %arg2[%4, %c0, %c0_0] : memref<2x8x128xf32, #tpu.memory_space<vmem>>, vector<1x8x128xf32>
    %6 = vector.shape_cast %5 : vector<1x8x128xf32> to vector<8x128xf32>
    %7 = arith.index_cast %3 : i32 to index
    %c0_1 = arith.constant 0 : index
    %c0_2 = arith.constant 0 : index
    %8 = vector.load %arg3[%7, %c0_1, %c0_2] : memref<2x128x128xf32, #tpu.memory_space<vmem>>, vector<1x128x128xf32>
    %9 = vector.shape_cast %8 : vector<1x128x128xf32> to vector<128x128xf32>
    %cst = arith.constant dense<0.000000e+00> : vector<8x128xf32>
    %10 = tpu.matmul %6, %9, %cst {dimension_numbers = #tpu.dot_dimension_numbers<[1], [0], [0], [1], [0, 0, 1, 1], [], []>} : vector<8x128xf32>, vector<128x128xf32>, vector<8x128xf32> -> vector<8x128xf32>
    %11 = arith.index_cast %3 : i32 to index
    %c0_3 = arith.constant 0 : index
    %12 = vector.load %arg4[%11, %c0_3] : memref<2x128xf32, #tpu.memory_space<vmem>>, vector<1x128xf32>
    %13 = vector.broadcast %12 : vector<1x128xf32> to vector<8x128xf32>
    %14 = arith.addf %10, %13 : vector<8x128xf32>
    %15 = arith.index_cast %c0_i32 : i32 to index
    %c0_4 = arith.constant 0 : index
    %c0_5 = arith.constant 0 : index
    %16 = vector.load %arg5[%15, %c0_4, %c0_5] : memref<2x8x128xf32, #tpu.memory_space<vmem>>, vector<1x8x128xf32>
    %17 = vector.shape_cast %16 : vector<1x8x128xf32> to vector<8x128xf32>
    %18 = vector.shape_cast %14 : vector<8x128xf32> to vector<1x8x128xf32>
    tpu.vector_store %arg5[%15, %c0_4, %c0_5], %18 {strides = array<i32>} : memref<2x8x128xf32, #tpu.memory_space<vmem>>, vector<1x8x128xf32>,
    %c1_i32 = arith.constant 1 : i32
    %19 = arith.addi %0, %c1_i32 : i32
    %20 = arith.index_cast %19 : i32 to index
    %21 = memref.load %arg1[%20] : memref<2xi32, #tpu.memory_space<smem>>
    %22 = arith.index_cast %c1_i32 : i32 to index
    %c0_6 = arith.constant 0 : index
    %c0_7 = arith.constant 0 : index
    %23 = vector.load %arg2[%22, %c0_6, %c0_7] : memref<2x8x128xf32, #tpu.memory_space<vmem>>, vector<1x8x128xf32>
    %24 = vector.shape_cast %23 : vector<1x8x128xf32> to vector<8x128xf32>
    %25 = arith.index_cast %21 : i32 to index
    %c0_8 = arith.constant 0 : index
    %c0_9 = arith.constant 0 : index
    %26 = vector.load %arg3[%25, %c0_8, %c0_9] : memref<2x128x128xf32, #tpu.memory_space<vmem>>, vector<1x128x128xf32>
    %27 = vector.shape_cast %26 : vector<1x128x128xf32> to vector<128x128xf32>
    %cst_10 = arith.constant dense<0.000000e+00> : vector<8x128xf32>
    %28 = tpu.matmul %24, %27, %cst_10 {dimension_numbers = #tpu.dot_dimension_numbers<[1], [0], [0], [1], [0, 0, 1, 1], [], []>} : vector<8x128xf32>, vector<128x128xf32>, vector<8x128xf32> -> vector<8x128xf32>
    %29 = arith.index_cast %21 : i32 to index
    %c0_11 = arith.constant 0 : index
    %30 = vector.load %arg4[%29, %c0_11] : memref<2x128xf32, #tpu.memory_space<vmem>>, vector<1x128xf32>
    %31 = vector.broadcast %30 : vector<1x128xf32> to vector<8x128xf32>
    %32 = arith.addf %28, %31 : vector<8x128xf32>
    %33 = arith.index_cast %c1_i32 : i32 to index
    %c0_12 = arith.constant 0 : index
    %c0_13 = arith.constant 0 : index
    %34 = vector.load %arg5[%33, %c0_12, %c0_13] : memref<2x8x128xf32, #tpu.memory_space<vmem>>, vector<1x8x128xf32>
    %35 = vector.shape_cast %34 : vector<1x8x128xf32> to vector<8x128xf32>
    %36 = vector.shape_cast %32 : vector<8x128xf32> to vector<1x8x128xf32>
    tpu.vector_store %arg5[%33, %c0_12, %c0_13], %36 {strides = array<i32>} : memref<2x8x128xf32, #tpu.memory_space<vmem>>, vector<1x8x128xf32>,
    %c2_i32_14 = arith.constant 2 : i32
    return
  }
  func.func @transform_0(%arg0: i32, %arg1: memref<2xi32, #tpu.memory_space<smem>>) -> (i32, i32, i32) {
    %c0_i32 = arith.constant 0 : i32
    %c0_i32_0 = arith.constant 0 : i32
    %c0_i32_1 = arith.constant 0 : i32
    return %arg0, %c0_i32, %c0_i32_0 : i32, i32, i32
  }
  func.func @transform_1(%arg0: i32, %arg1: memref<2xi32, #tpu.memory_space<smem>>) -> (i32, i32, i32) {
    %c0_i32 = arith.constant 0 : i32
    %c0_i32_0 = arith.constant 0 : i32
    %c0_i32_1 = arith.constant 0 : i32
    %c0_i32_2 = arith.constant 0 : i32
    return %c0_i32, %c0_i32_0, %c0_i32_1 : i32, i32, i32
  }
  func.func @transform_2(%arg0: i32, %arg1: memref<2xi32, #tpu.memory_space<smem>>) -> (i32, i32) {
    %c0_i32 = arith.constant 0 : i32
    %c0_i32_0 = arith.constant 0 : i32
    %c0_i32_1 = arith.constant 0 : i32
    return %c0_i32, %c0_i32_0 : i32, i32
  }
  func.func @transform_3(%arg0: i32, %arg1: memref<2xi32, #tpu.memory_space<smem>>) -> (i32, i32, i32) {
    %c0_i32 = arith.constant 0 : i32
    %c0_i32_0 = arith.constant 0 : i32
    %c0_i32_1 = arith.constant 0 : i32
    return %arg0, %c0_i32, %c0_i32_0 : i32, i32, i32
  }
}

</mosaic_0001>

<llo_original>
// kernel: tpu_custom_call.1
$region0: #{tpu_custom_call.1}
  #allocation0 [shape = 'u32[]', space=smem, size = 0x4, offset = 0x4, fixed_abs, tag = 'smem constant byte address 0x4 - core index']
  #allocation1 [shape = 'u32[144,128]{1,0:T(1,128)}', space=vmem, size = 0x12000, scoped, tag = 'internal scratch']
  #allocation2 [shape = 's32[1]{0}', space=sflag, size = 0x4, scoped, tag = 'scoped memory for tpu_custom_call.1']
  #allocation3 [shape = 'u8[512]{0}', space=smem, size = 0x200, scoped, tag = 'prefetched SMEM operand 0']
  %s0 = inlined_call_operand.hbm [shape: s32[2], index: 0, kind: input, shape index: {}]
  %s1 = inlined_call_operand.hbm [shape: f32[2,8,128], index: 1, kind: input, shape index: {}]
  %s2 = inlined_call_operand.hbm [shape: f32[2,128,128], index: 2, kind: input, shape index: {}]
  %s3 = inlined_call_operand.vmem [shape: f32[2,128], index: 3, kind: input, shape index: {}]
  %s4 = inlined_call_operand.hbm [shape: f32[2,8,128], index: 4, kind: output, shape index: {}]
  %s5 = sld [smem:[#allocation0]]
  $region30: #{tpu_custom_call.1} parent=0
    _
  %s7 = ssub.s32 1, %s5
  %s8 = scalar_select 0, %s7, %s5
  %10 = dma.hbm_to_smem %s0, 16, [#allocation3], [#allocation2]
  %11 = dma.done [#allocation2], 16
  %12 = sfence
  $region1: #{tpu_custom_call.1} parent=0
    #allocation4 [shape = 'u8[8192]{0}', space=vmem, size = 0x2000, scoped, tag = 'input window, operand 1, single buffered']
    #allocation5 [shape = 's32[1]{0}', space=sflag, size = 0x4, scoped, tag = 'scoped memory for tpu_custom_call.1']
    #allocation6 [shape = 's32[1]{0}', space=sflag, size = 0x4, scoped, tag = 'scoped memory for tpu_custom_call.1']
    #allocation7 [shape = 'u8[131072]{0}', space=vmem, size = 0x20000, scoped, tag = 'input window, operand 2, single buffered']
    #allocation8 [shape = 's32[1]{0}', space=sflag, size = 0x4, scoped, tag = 'scoped memory for tpu_custom_call.1']
    #allocation9 [shape = 'u8[8192]{0}', space=vmem, size = 0x2000, scoped, tag = 'output window, operand 0, single buffered']
    %13 = vsyncpa [#allocation5], 0
    %14 = vsyncpa [#allocation8], 0
    %15 = vsyncpa [#allocation6], 0
    // Predicated region
    $region2: #{tpu_custom_call.1} parent=1 // pred_check
      _
    $region3: #{tpu_custom_call.1} parent=1 // pred_check_branch
      %17 = sbr.rel (0) target = $region5
    $region4: #{tpu_custom_call.1} parent=1 // pred_region
      %s19 = ssub.s32 256, 256
      %20 = vsyncadd [#allocation5], %s19
      %s21 = sshll.u32 [#allocation4], 4
      %s22 = int_to_ptr.vmem [resolvable:$true] %s21
      %27 = dma.hbm_to_vmem [thread:$0]  %s1, 256, %s22, [#allocation5], 128, 128, 8
    $region5: #{tpu_custom_call.1} parent=1 // pred_fallthru
      _
    // Predicated region
    $region6: #{tpu_custom_call.1} parent=1 // pred_check
      _
    $region7: #{tpu_custom_call.1} parent=1 // pred_check_branch
      %29 = sbr.rel (0) target = $region9
    $region8: #{tpu_custom_call.1} parent=1 // pred_region
      %s31 = ssub.s32 4096, 4096
      %32 = vsyncadd [#allocation8], %s31
      %s33 = sshll.u32 [#allocation7], 4
      %s34 = int_to_ptr.vmem [resolvable:$true] %s33
      %39 = dma.hbm_to_vmem [thread:$0]  %s2, 4096, %s34, [#allocation8], 128, 128, 8
    $region9: #{tpu_custom_call.1} parent=1 // pred_fallthru
      _
    // Predicated region
    $region10: #{tpu_custom_call.1} parent=1 // pred_check
      _
    $region11: #{tpu_custom_call.1} parent=1 // pred_check_branch
      %41 = sbr.rel (0) target = $region13
    $region12: #{tpu_custom_call.1} parent=1 // pred_region
      _
    $region13: #{tpu_custom_call.1} parent=1 // pred_fallthru
      _
    // Predicated region
    $region14: #{tpu_custom_call.1} parent=1 // pred_check
      _
    $region15: #{tpu_custom_call.1} parent=1 // pred_check_branch
      %43 = sbr.rel (0) target = $region17
    $region16: #{tpu_custom_call.1} parent=1 // pred_region
      %44 = dma.done [#allocation5], 256
    $region17: #{tpu_custom_call.1} parent=1 // pred_fallthru
      _
    // Predicated region
    $region18: #{tpu_custom_call.1} parent=1 // pred_check
      _
    $region19: #{tpu_custom_call.1} parent=1 // pred_check_branch
      %46 = sbr.rel (0) target = $region21
    $region20: #{tpu_custom_call.1} parent=1 // pred_region
      %47 = dma.done [#allocation8], 4096
    $region21: #{tpu_custom_call.1} parent=1 // pred_fallthru
      _
    %s48 = smul.u32 0, 2
    %s49 = sld [smem:[#allocation3 + %s48]]
    %v50 = vld [vmem:[#allocation4] sm:$0xff]
    %s51 = smul.u32 %s49, 128
    %s52 = scalar_lea.vmem [#allocation7], %s51
    %v53 = vld [vmem:[%s52] sm:$0xff]
    %v54 = vld [vmem:[%s52 + $0x8] sm:$0xff]
    %v55 = vld [vmem:[%s52 + $0x10] sm:$0xff]
    %v56 = vld [vmem:[%s52 + $0x18] sm:$0xff]
    %v57 = vld [vmem:[%s52 + $0x20] sm:$0xff]
    %v58 = vld [vmem:[%s52 + $0x28] sm:$0xff]
    %v59 = vld [vmem:[%s52 + $0x30] sm:$0xff]
    %v60 = vld [vmem:[%s52 + $0x38] sm:$0xff]
    %v61 = vld [vmem:[%s52 + $0x40] sm:$0xff]
    %v62 = vld [vmem:[%s52 + $0x48] sm:$0xff]
    %v63 = vld [vmem:[%s52 + $0x50] sm:$0xff]
    %v64 = vld [vmem:[%s52 + $0x58] sm:$0xff]
    %v65 = vld [vmem:[%s52 + $0x60] sm:$0xff]
    %v66 = vld [vmem:[%s52 + $0x68] sm:$0xff]
    %v67 = vld [vmem:[%s52 + $0x70] sm:$0xff]
    %v68 = vld [vmem:[%s52 + $0x78] sm:$0xff]
    %s69 = scalar_lea.vmem %s3, %s49
    %v70 = vld [vmem:[%s69] sm:$0x1]
    %v71 = vlaneseq
    %v72 = vshrl.u32 %v71, 7
    %v73 = vsub.s32 0, %v72
    %v74 = vrot.slane %v70, %v73
    %75 = vmatprep.subr.mxu0 0.0
    %76 = vmatpush1.msra.mxu0 %v53
    %77 = vmatprep.subr.mxu0 0.0
    %78 = vmatpush1.msra.mxu0 %v54
    %79 = vmatprep.subr.mxu0 0.0
    %80 = vmatpush1.msra.mxu0 %v55
    %81 = vmatprep.subr.mxu0 0.0
    %82 = vmatpush1.msra.mxu0 %v56
    %83 = vmatprep.subr.mxu0 0.0
    %84 = vmatpush1.msra.mxu0 %v57
    %85 = vmatprep.subr.mxu0 0.0
    %86 = vmatpush1.msra.mxu0 %v58
    %87 = vmatprep.subr.mxu0 0.0
    %88 = vmatpush1.msra.mxu0 %v59
    %89 = vmatprep.subr.mxu0 0.0
    %90 = vmatpush1.msra.mxu0 %v60
    %91 = vmatprep.subr.mxu0 0.0
    %92 = vmatpush1.msra.mxu0 %v61
    %93 = vmatprep.subr.mxu0 0.0
    %94 = vmatpush1.msra.mxu0 %v62
    %95 = vmatprep.subr.mxu0 0.0
    %96 = vmatpush1.msra.mxu0 %v63
    %97 = vmatprep.subr.mxu0 0.0
    %98 = vmatpush1.msra.mxu0 %v64
    %99 = vmatprep.subr.mxu0 0.0
    %100 = vmatpush1.msra.mxu0 %v65
    %101 = vmatprep.subr.mxu0 0.0
    %102 = vmatpush1.msra.mxu0 %v66
    %103 = vmatprep.subr.mxu0 0.0
    %104 = vmatpush1.msra.mxu0 %v67
    %105 = vmatprep.subr.mxu0 0.0
    %106 = vmatpush1.msra.mxu0 %v68
    %107 = vmatprep.subr.mxu0 0.0
    %108 = vmatpush1.msra.mxu0 0.0
    %109 = vmatprep.subr.mxu0 0.0
    %110 = vmatpush1.msra.mxu0 0.0
    %111 = vmatprep.subr.mxu0 0.0
    %112 = vmatpush1.msra.mxu0 0.0
    %113 = vmatprep.subr.mxu0 0.0
    %114 = vmatpush1.msra.mxu0 0.0
    %115 = vmatprep.subr.mxu0 0.0
    %116 = vmatpush1.msra.mxu0 0.0
    %117 = vmatprep.subr.mxu0 0.0
    %118 = vmatpush1.msra.mxu0 0.0
    %119 = vmatprep.subr.mxu0 0.0
    %120 = vmatpush1.msra.mxu0 0.0
    %121 = vmatprep.subr.mxu0 0.0
    %122 = vmatpush1.msra.mxu0 0.0
    %123 = vmatprep.subr.mxu0 0.0
    %124 = vmatpush1.msra.mxu0 0.0
    %125 = vmatprep.subr.mxu0 0.0
    %126 = vmatpush1.msra.mxu0 0.0
    %127 = vmatprep.subr.mxu0 0.0
    %128 = vmatpush1.msra.mxu0 0.0
    %129 = vmatprep.subr.mxu0 0.0
    %130 = vmatpush1.msra.mxu0 0.0
    %131 = vmatprep.subr.mxu0 0.0
    %132 = vmatpush1.msra.mxu0 0.0
    %133 = vmatprep.subr.mxu0 0.0
    %134 = vmatpush1.msra.mxu0 0.0
    %135 = vmatprep.subr.mxu0 0.0
    %136 = vmatpush1.msra.mxu0 0.0
    %137 = vmatprep.subr.mxu0 0.0
    %138 = vmatpush1.msra.mxu0 0.0
    %139 = vmatprep.mubr.f32.mxu0 0.0
    %140 = vmatmul.mubr.f32.gmra.mrb[0].mxu0 %v50
    %v141 = vpop.f32.mrb[0].mxu0
    %v142 = vadd.f32 %v74, %v141
    %v143 = vpop.f32.mrb[0].mxu0
    %144 = vdwg.mxu0
    %145 = vst [vmem:[#allocation9] sm:$0xff] %v142
    %s146 = sadd.s32 %s48, 1
    %s147 = sld [smem:[#allocation3 + %s146]]
    %s148 = scalar_lea.vmem [#allocation4], 8
    %v149 = vld [vmem:[%s148] sm:$0xff]
    %s150 = smul.u32 %s147, 128
    %s151 = scalar_lea.vmem [#allocation7], %s150
    %v152 = vld [vmem:[%s151] sm:$0xff]
    %v153 = vld [vmem:[%s151 + $0x8] sm:$0xff]
    %v154 = vld [vmem:[%s151 + $0x10] sm:$0xff]
    %v155 = vld [vmem:[%s151 + $0x18] sm:$0xff]
    %v156 = vld [vmem:[%s151 + $0x20] sm:$0xff]
    %v157 = vld [vmem:[%s151 + $0x28] sm:$0xff]
    %v158 = vld [vmem:[%s151 + $0x30] sm:$0xff]
    %v159 = vld [vmem:[%s151 + $0x38] sm:$0xff]
    %v160 = vld [vmem:[%s151 + $0x40] sm:$0xff]
    %v161 = vld [vmem:[%s151 + $0x48] sm:$0xff]
    %v162 = vld [vmem:[%s151 + $0x50] sm:$0xff]
    %v163 = vld [vmem:[%s151 + $0x58] sm:$0xff]
    %v164 = vld [vmem:[%s151 + $0x60] sm:$0xff]
    %v165 = vld [vmem:[%s151 + $0x68] sm:$0xff]
    %v166 = vld [vmem:[%s151 + $0x70] sm:$0xff]
    %v167 = vld [vmem:[%s151 + $0x78] sm:$0xff]
    %s168 = scalar_lea.vmem %s3, %s147
    %v169 = vld [vmem:[%s168] sm:$0x1]
    %v170 = vlaneseq
    %v171 = vshrl.u32 %v170, 7
    %v172 = vsub.s32 0, %v171
    %v173 = vrot.slane %v169, %v172
    %174 = vmatprep.subr.mxu0 0.0
    %175 = vmatpush1.msra.mxu0 %v152
    %176 = vmatprep.subr.mxu0 0.0
    %177 = vmatpush1.msra.mxu0 %v153
    %178 = vmatprep.subr.mxu0 0.0
    %179 = vmatpush1.msra.mxu0 %v154
    %180 = vmatprep.subr.mxu0 0.0
    %181 = vmatpush1.msra.mxu0 %v155
    %182 = vmatprep.subr.mxu0 0.0
    %183 = vmatpush1.msra.mxu0 %v156
    %184 = vmatprep.subr.mxu0 0.0
    %185 = vmatpush1.msra.mxu0 %v157
    %186 = vmatprep.subr.mxu0 0.0
    %187 = vmatpush1.msra.mxu0 %v158
    %188 = vmatprep.subr.mxu0 0.0
    %189 = vmatpush1.msra.mxu0 %v159
    %190 = vmatprep.subr.mxu0 0.0
    %191 = vmatpush1.msra.mxu0 %v160
    %192 = vmatprep.subr.mxu0 0.0
    %193 = vmatpush1.msra.mxu0 %v161
    %194 = vmatprep.subr.mxu0 0.0
    %195 = vmatpush1.msra.mxu0 %v162
    %196 = vmatprep.subr.mxu0 0.0
    %197 = vmatpush1.msra.mxu0 %v163
    %198 = vmatprep.subr.mxu0 0.0
    %199 = vmatpush1.msra.mxu0 %v164
    %200 = vmatprep.subr.mxu0 0.0
    %201 = vmatpush1.msra.mxu0 %v165
    %202 = vmatprep.subr.mxu0 0.0
    %203 = vmatpush1.msra.mxu0 %v166
    %204 = vmatprep.subr.mxu0 0.0
    %205 = vmatpush1.msra.mxu0 %v167
    %206 = vmatprep.subr.mxu0 0.0
    %207 = vmatpush1.msra.mxu0 0.0
    %208 = vmatprep.subr.mxu0 0.0
    %209 = vmatpush1.msra.mxu0 0.0
    %210 = vmatprep.subr.mxu0 0.0
    %211 = vmatpush1.msra.mxu0 0.0
    %212 = vmatprep.subr.mxu0 0.0
    %213 = vmatpush1.msra.mxu0 0.0
    %214 = vmatprep.subr.mxu0 0.0
    %215 = vmatpush1.msra.mxu0 0.0
    %216 = vmatprep.subr.mxu0 0.0
    %217 = vmatpush1.msra.mxu0 0.0
    %218 = vmatprep.subr.mxu0 0.0
    %219 = vmatpush1.msra.mxu0 0.0
    %220 = vmatprep.subr.mxu0 0.0
    %221 = vmatpush1.msra.mxu0 0.0
    %222 = vmatprep.subr.mxu0 0.0
    %223 = vmatpush1.msra.mxu0 0.0
    %224 = vmatprep.subr.mxu0 0.0
    %225 = vmatpush1.msra.mxu0 0.0
    %226 = vmatprep.subr.mxu0 0.0
    %227 = vmatpush1.msra.mxu0 0.0
    %228 = vmatprep.subr.mxu0 0.0
    %229 = vmatpush1.msra.mxu0 0.0
    %230 = vmatprep.subr.mxu0 0.0
    %231 = vmatpush1.msra.mxu0 0.0
    %232 = vmatprep.subr.mxu0 0.0
    %233 = vmatpush1.msra.mxu0 0.0
    %234 = vmatprep.subr.mxu0 0.0
    %235 = vmatpush1.msra.mxu0 0.0
    %236 = vmatprep.subr.mxu0 0.0
    %237 = vmatpush1.msra.mxu0 0.0
    %238 = vmatprep.mubr.f32.mxu0 0.0
    %239 = vmatmul.mubr.f32.gmra.mrb[0].mxu0 %v149
    %v240 = vpop.f32.mrb[0].mxu0
    %v241 = vadd.f32 %v173, %v240
    %v242 = vpop.f32.mrb[0].mxu0
    %243 = vdwg.mxu0
    %s244 = scalar_lea.vmem [#allocation9], 8
    %245 = vst [vmem:[%s244] sm:$0xff] %v241
    // Predicated region
    $region22: #{tpu_custom_call.1} parent=1 // pred_check
      _
    $region23: #{tpu_custom_call.1} parent=1 // pred_check_branch
      %247 = sbr.rel (0) target = $region25
    $region24: #{tpu_custom_call.1} parent=1 // pred_region
      %s249 = ssub.s32 256, 256
      %250 = vsyncadd [#allocation6], %s249
      %s251 = sshll.u32 [#allocation9], 4
      %s252 = int_to_ptr.vmem [resolvable:$true] %s251
      %257 = dma.vmem_to_hbm [thread:$0]  %s252, 256, %s4, [#allocation6], 128, 128, 8
    $region25: #{tpu_custom_call.1} parent=1 // pred_fallthru
      _
    // Predicated region
    $region26: #{tpu_custom_call.1} parent=1 // pred_check
      _
    $region27: #{tpu_custom_call.1} parent=1 // pred_check_branch
      %259 = sbr.rel (0) target = $region29
    $region28: #{tpu_custom_call.1} parent=1 // pred_region
      %260 = dma.done [#allocation6], 256
    $region29: #{tpu_custom_call.1} parent=1 // pred_fallthru
      _
    %261 = vsyncpa [#allocation5], 1
    %262 = vsyncpa [#allocation8], 1
    %263 = vsyncpa [#allocation6], 1

</llo_original>
